<compile_context>
chip_gen: v6e
topology: v6e:2x2x1
jax: 0.10.0
libtpu: 0.0.40
codegen_flags: <defaults>
</compile_context>

<pallas_src>
import jax
import jax.numpy as jnp
from jax.experimental import pallas as pl
from jax.experimental.pallas import tpu as pltpu


def _attention_kernel(emb_ref, w_ref, b_ref, ctx_ref, scores_ref):
    # emb_ref:    (TB, S, D) block of embeddings, native dtype (f32 or bf16)
    # w_ref:      (1, D)     Linear(D, 1) weight row, same dtype as embeddings
    # b_ref:      (1,)       Linear bias (f32), in SMEM
    # ctx_ref:    (TB, D)    context vectors
    # scores_ref: (TB, S)    softmax scores (lane-dense; wrapper reshapes to (B, S, 1))
    emb = emb_ref[...]                                      # (TB, S, D) native dtype
    w = w_ref[...]                                          # (1, D)     native dtype
    b = b_ref[0]                                            # f32 scalar from SMEM

    # logits = emb @ w^T + b : native-dtype mul (single VPU pass over the streamed tile),
    # f32 accumulation for the lane reduction over D -> lane-dense (TB, S).
    logits = jnp.sum((emb * w[None, :, :]).astype(jnp.float32), axis=-1) + b

    # Row-wise softmax over the sequence axis (cheap lane reductions).
    m = jnp.max(logits, axis=-1, keepdims=True)             # (TB, 1)
    e = jnp.exp(logits - m)                                 # (TB, S) f32
    denom = jnp.sum(e, axis=-1, keepdims=True)              # (TB, 1)
    scores = e * pl.reciprocal(denom, approx=False)         # (TB, S) f32, exact

    # context[b, :] = sum_s scores[b, s] * emb[b, s, :]
    # Batched (1,S)x(S,D) on the MXU with native-dtype operands, f32 accumulation.
    ctx = jnp.einsum(
        "bqs,bsd->bqd",
        scores[:, None, :].astype(emb.dtype), emb,
        preferred_element_type=jnp.float32,
    )[:, 0, :]                                              # (TB, D) f32

    ctx_ref[...] = ctx.astype(ctx_ref.dtype)
    scores_ref[...] = scores.astype(scores_ref.dtype)


def _vmem_budget():
    """(vmem_limit_bytes, working_budget_bytes) derived from this chip's VMEM capacity."""
    try:
        info = pltpu.get_tpu_info()
        vmem_cap = int(getattr(info, "vmem_capacity_bytes", 64 << 20))
    except Exception:
        vmem_cap = 64 << 20                                 # conservative (v7x-sized)
    vmem_limit = min(int(vmem_cap * 0.7), 96 << 20)         # ~45 MiB on v7x, ~90 MiB on v5e/v6e
    return vmem_limit, vmem_limit // 2


def _pick_tiling(B, S, D, itemsize, budget_bytes):
    """Batch tile TB (sublane-aligned) and padded batch size so padded_B % TB == 0."""
    sub = max(8, 32 // itemsize)                            # 8 for f32, 16 for bf16
    # Per batch row: double-buffered input + output blocks, plus in-kernel temporaries
    # (f32 product feeding the D-reduce, f32 e/scores/logits rows, f32 ctx accumulator).
    row_bytes = 2 * (S * D + S + D) * itemsize + (S * D + 4 * (S + D)) * 4
    cap_rows = max(1, budget_bytes // max(row_bytes, 1))
    tb = max(sub, (cap_rows // sub) * sub)                  # sublane-aligned tile
    tb = min(tb, pl.cdiv(B, sub) * sub)                     # never tile past the batch
    padded_b = pl.cdiv(B, tb) * tb
    return tb, padded_b


def attention_layer(embeddings, weight, bias):
    """embeddings: (B, S, D); weight: (D,); bias: scalar.
    Returns (context_vector (B, D), scores (B, S, 1)), matching the PyTorch module."""
    B, S, D = embeddings.shape
    dtype = embeddings.dtype
    itemsize = jnp.dtype(dtype).itemsize

    vmem_limit, budget = _vmem_budget()
    TB, padded_B = _pick_tiling(B, S, D, itemsize, budget)
    grid = (padded_B // TB,)

    emb_in = embeddings
    if padded_B != B:
        # Zero-padded rows give finite logits (== bias) -> NaN-free softmax; sliced off below.
        emb_in = jnp.pad(embeddings, ((0, padded_B - B), (0, 0), (0, 0)))

    w2d = jnp.asarray(weight, dtype).reshape(1, D)          # native dtype -> single-pass mul/MXU
    b1 = jnp.asarray(bias, jnp.float32).reshape(1)

    out_shapes = (
        jax.ShapeDtypeStruct((padded_B, D), dtype),
        jax.ShapeDtypeStruct((padded_B, S), dtype),         # lane-dense scores; reshaped below
    )

    grid_spec = pltpu.PrefetchScalarGridSpec(
        num_scalar_prefetch=0,
        grid=grid,
        in_specs=[
            pl.BlockSpec((TB, S, D), lambda i: (i, 0, 0)),          # TB batch rows / step
            pl.BlockSpec((1, D), lambda i: (0, 0)),                 # weight row (tiny)
            pl.BlockSpec(memory_space=pltpu.MemorySpace.SMEM),      # bias scalar in SMEM
        ],
        out_specs=[
            pl.BlockSpec((TB, D), lambda i: (i, 0)),
            pl.BlockSpec((TB, S), lambda i: (i, 0)),
        ],
    )

    ctx, scores = pl.pallas_call(
        _attention_kernel,
        out_shape=out_shapes,
        grid_spec=grid_spec,
        compiler_params=pltpu.CompilerParams(
            dimension_semantics=("parallel",),
            vmem_limit_bytes=vmem_limit,
        ),
    )(emb_in, w2d, b1)

    ctx = ctx[:B]
    scores = scores[:B]
    # Module contract: scores shaped (B, S, 1). Cheap wrapper reshape outside the kernel.
    return ctx, scores.reshape(B, S, 1)


def _reference(embeddings, weight, bias):
    emb = embeddings.astype(jnp.float32)
    logits = jnp.einsum("bsd,d->bs", emb, weight.astype(jnp.float32))[..., None] + bias
    scores = jax.nn.softmax(logits, axis=1)
    ctx = jnp.sum(scores * emb, axis=1)
    return ctx, scores


if __name__ == "__main__":
    key = jax.random.PRNGKey(0)
    B, S, D = 2, 8, 32   # batch=2, seq=8, input_dim=32

    k_emb, k_w, k_b = jax.random.split(key, 3)
    embeddings = jax.random.normal(k_emb, (B, S, D), dtype=jnp.float32)
    # deterministic "Linear(D, 1)" parameters (synthetic, not a checkpoint load)
    weight = jax.random.normal(k_w, (D,), dtype=jnp.float32) * 0.1
    bias = jax.random.normal(k_b, (), dtype=jnp.float32) * 0.1

    ctx, scores = attention_layer(embeddings, weight, bias)
    jax.block_until_ready((ctx, scores))

    ref_ctx, ref_scores = _reference(embeddings, weight, bias)
    assert ctx.shape == (B, D) and scores.shape == (B, S, 1)
    assert jnp.allclose(ctx, ref_ctx, atol=1e-5, rtol=1e-5)
    assert jnp.allclose(scores, ref_scores, atol=1e-5, rtol=1e-5)

    print("KERNEL_OK")
</pallas_src>

<mosaic_0001>
module attributes {stable_mosaic.version = 11 : i64} {
  func.func @_attention_kernel(%arg0: i32, %arg1: memref<8x8x32xf32, #tpu.memory_space<vmem>>, %arg2: memref<1x32xf32, #tpu.memory_space<vmem>>, %arg3: memref<1xf32, #tpu.memory_space<smem>>, %arg4: memref<8x32xf32, #tpu.memory_space<vmem>>, %arg5: memref<8x8xf32, #tpu.memory_space<vmem>>) attributes {dimension_semantics = [#tpu.dimension_semantics<parallel>], iteration_bounds = array<i64: 1>, scalar_prefetch = 0 : i64, scratch_operands = 0 : i64, tpu.core_type = #tpu.core_type<tc>, window_params = [{transform_indices = @transform_0, window_bounds = array<i64: 8, 8, 32>}, {pipeline_mode = #tpu.pipeline_mode<synchronous>, transform_indices = @transform_1, window_bounds = array<i64: 1, 32>}, {transform_indices = @transform_2, window_bounds = array<i64: 1>}, {transform_indices = @transform_3, window_bounds = array<i64: 8, 32>}, {transform_indices = @transform_4, window_bounds = array<i64: 8, 8>}]} {
    %c0 = arith.constant 0 : index
    %c0_0 = arith.constant 0 : index
    %c0_1 = arith.constant 0 : index
    %0 = vector.load %arg1[%c0, %c0_0, %c0_1] : memref<8x8x32xf32, #tpu.memory_space<vmem>>, vector<8x8x32xf32>
    %c0_2 = arith.constant 0 : index
    %c0_3 = arith.constant 0 : index
    %1 = vector.load %arg2[%c0_2, %c0_3] : memref<1x32xf32, #tpu.memory_space<vmem>>, vector<1x32xf32>
    %c0_4 = arith.constant 0 : index
    %2 = memref.load %arg3[%c0_4] : memref<1xf32, #tpu.memory_space<smem>>
    %3 = vector.shape_cast %1 : vector<1x32xf32> to vector<1x1x32xf32>
    %4 = vector.broadcast %3 : vector<1x1x32xf32> to vector<8x8x32xf32>
    %5 = arith.mulf %0, %4 : vector<8x8x32xf32>
    %cst = arith.constant dense<0.000000e+00> : vector<8x8xf32>
    %6 = vector.multi_reduction <add>, %5, %cst [2] : vector<8x8x32xf32> to vector<8x8xf32>
    %7 = vector.broadcast %2 : f32 to vector<8x8xf32>
    %8 = arith.addf %6, %7 : vector<8x8xf32>
    %cst_5 = arith.constant dense<0xFF800000> : vector<8xf32>
    %9 = vector.multi_reduction <maximumf>, %8, %cst_5 [1] : vector<8x8xf32> to vector<8xf32>
    %10 = vector.shape_cast %9 : vector<8xf32> to vector<8x1xf32>
    %11 = vector.broadcast %10 : vector<8x1xf32> to vector<8x8xf32>
    %12 = arith.subf %8, %11 : vector<8x8xf32>
    %13 = math.exp %12 : vector<8x8xf32>
    %cst_6 = arith.constant dense<0.000000e+00> : vector<8xf32>
    %14 = vector.multi_reduction <add>, %13, %cst_6 [1] : vector<8x8xf32> to vector<8xf32>
    %15 = vector.shape_cast %14 : vector<8xf32> to vector<8x1xf32>
    %16 = tpu.reciprocal %15 : vector<8x1xf32> -> vector<8x1xf32>
    %17 = vector.broadcast %16 : vector<8x1xf32> to vector<8x8xf32>
    %18 = arith.mulf %13, %17 : vector<8x8xf32>
    %19 = vector.shape_cast %18 : vector<8x8xf32> to vector<8x1x8xf32>
    "tpu.trace_start"() <{level = 10 : i32, message = "bqs,bsd->bqd"}> : () -> ()
    %cst_7 = arith.constant dense<0.000000e+00> : vector<8x1x32xf32>
    %20 = tpu.matmul %19, %0, %cst_7 {dimension_numbers = #tpu.dot_dimension_numbers<[2], [1], [1], [2], [0, 0, 0, 1, 1, 2], [0], [0]>} : vector<8x1x8xf32>, vector<8x8x32xf32>, vector<8x1x32xf32> -> vector<8x1x32xf32>
    "tpu.trace_stop"() : () -> ()
    %21 = vector.shape_cast %20 : vector<8x1x32xf32> to vector<8x32xf32>
    %c0_8 = arith.constant 0 : index
    %c0_9 = arith.constant 0 : index
    %22 = vector.load %arg4[%c0_8, %c0_9] : memref<8x32xf32, #tpu.memory_space<vmem>>, vector<8x32xf32>
    tpu.vector_store %arg4[%c0_8, %c0_9], %21 {strides = array<i32>} : memref<8x32xf32, #tpu.memory_space<vmem>>, vector<8x32xf32>,
    %c0_10 = arith.constant 0 : index
    %c0_11 = arith.constant 0 : index
    %23 = vector.load %arg5[%c0_10, %c0_11] : memref<8x8xf32, #tpu.memory_space<vmem>>, vector<8x8xf32>
    tpu.vector_store %arg5[%c0_10, %c0_11], %18 {strides = array<i32>} : memref<8x8xf32, #tpu.memory_space<vmem>>, vector<8x8xf32>,
    return
  }
  func.func @transform_0(%arg0: i32) -> (i32, i32, i32) {
    %c0_i32 = arith.constant 0 : i32
    %c0_i32_0 = arith.constant 0 : i32
    %c0_i32_1 = arith.constant 0 : i32
    return %arg0, %c0_i32, %c0_i32_0 : i32, i32, i32
  }
  func.func @transform_1(%arg0: i32) -> (i32, i32) {
    %c0_i32 = arith.constant 0 : i32
    %c0_i32_0 = arith.constant 0 : i32
    %c0_i32_1 = arith.constant 0 : i32
    return %c0_i32, %c0_i32_0 : i32, i32
  }
  func.func @transform_2(%arg0: i32) -> i32 {
    %c0_i32 = arith.constant 0 : i32
    %c0_i32_0 = arith.constant 0 : i32
    return %c0_i32 : i32
  }
  func.func @transform_3(%arg0: i32) -> (i32, i32) {
    %c0_i32 = arith.constant 0 : i32
    %c0_i32_0 = arith.constant 0 : i32
    return %arg0, %c0_i32 : i32, i32
  }
  func.func @transform_4(%arg0: i32) -> (i32, i32) {
    %c0_i32 = arith.constant 0 : i32
    %c0_i32_0 = arith.constant 0 : i32
    return %arg0, %c0_i32 : i32, i32
  }
}

</mosaic_0001>

<llo_original>
// kernel: tpu_custom_call.1
$region0: #{tpu_custom_call.1}
  #allocation0 [shape = 'u32[]', space=smem, size = 0x4, offset = 0x4, fixed_abs, tag = 'smem constant byte address 0x4 - core index']
  #allocation1 [shape = 'u32[144,128]{1,0:T(1,128)}', space=vmem, size = 0x12000, scoped, tag = 'internal scratch']
  #allocation2 [shape = 'f32[1]{0:T(128)S(6)}', space=smem, size = 0x200, scoped, tag = 'scoped memory for tpu_custom_call.1']
  %s0 = inlined_call_operand.hbm [shape: f32[8,8,32], index: 0, kind: input, shape index: {}]
  %s1 = inlined_call_operand.vmem [shape: f32[1,32], index: 1, kind: input, shape index: {}]
  %s2 = inlined_call_operand.<no memory space> [shape: f32[1], index: 2, kind: input, shape index: {}]
  %s3 = inlined_call_operand.hbm [shape: f32[8,32], index: 3, kind: output, shape index: {0}]
  %s4 = inlined_call_operand.hbm [shape: f32[8,8], index: 4, kind: output, shape index: {1}]
  %5 = xla_tuple %s3, %s4
  %s6 = sld [smem:[#allocation0]]
  $region34: #{tpu_custom_call.1} parent=0
    _
  %s8 = ssub.s32 1, %s6
  %s9 = scalar_select 0, %s8, %s6
  %10 = sst [smem:[#allocation2]] %s2
  $region1: #{tpu_custom_call.1} parent=0
    #allocation3 [shape = 'u8[32768]{0}', space=vmem, size = 0x8000, scoped, tag = 'input window, operand 0, single buffered']
    #allocation4 [shape = 's32[1]{0}', space=sflag, size = 0x4, scoped, tag = 'scoped memory for tpu_custom_call.1']
    #allocation5 [shape = 's32[1]{0}', space=sflag, size = 0x4, scoped, tag = 'scoped memory for tpu_custom_call.1']
    #allocation6 [shape = 'u8[4096]{0}', space=vmem, size = 0x1000, scoped, tag = 'output window, operand 0, single buffered']
    #allocation7 [shape = 'u8[4096]{0}', space=vmem, size = 0x1000, scoped, tag = 'output window, operand 1, single buffered']
    #allocation8 [shape = 's32[1]{0}', space=sflag, size = 0x4, scoped, tag = 'scoped memory for tpu_custom_call.1']
    %11 = vsyncpa [#allocation4], 0
    %12 = vsyncpa [#allocation5], 0
    %13 = vsyncpa [#allocation8], 0
    // Predicated region
    $region2: #{tpu_custom_call.1} parent=1 // pred_check
      _
    $region3: #{tpu_custom_call.1} parent=1 // pred_check_branch
      %15 = sbr.rel (0) target = $region5
    $region4: #{tpu_custom_call.1} parent=1 // pred_region
      %s17 = ssub.s32 1024, 1024
      %18 = vsyncadd [#allocation4], %s17
      %s19 = sshll.u32 [#allocation3], 4
      %s20 = int_to_ptr.vmem [resolvable:$true] %s19
      %25 = dma.hbm_to_vmem [thread:$0]  %s0, 1024, %s20, [#allocation4], 128, 128, 8
    $region5: #{tpu_custom_call.1} parent=1 // pred_fallthru
      _
    // Predicated region
    $region6: #{tpu_custom_call.1} parent=1 // pred_check
      _
    $region7: #{tpu_custom_call.1} parent=1 // pred_check_branch
      %27 = sbr.rel (0) target = $region9
    $region8: #{tpu_custom_call.1} parent=1 // pred_region
      _
    $region9: #{tpu_custom_call.1} parent=1 // pred_fallthru
      _
    // Predicated region
    $region10: #{tpu_custom_call.1} parent=1 // pred_check
      _
    $region11: #{tpu_custom_call.1} parent=1 // pred_check_branch
      %29 = sbr.rel (0) target = $region13
    $region12: #{tpu_custom_call.1} parent=1 // pred_region
      _
    $region13: #{tpu_custom_call.1} parent=1 // pred_fallthru
      _
    // Predicated region
    $region14: #{tpu_custom_call.1} parent=1 // pred_check
      _
    $region15: #{tpu_custom_call.1} parent=1 // pred_check_branch
      %31 = sbr.rel (0) target = $region17
    $region16: #{tpu_custom_call.1} parent=1 // pred_region
      %32 = dma.done [#allocation4], 1024
    $region17: #{tpu_custom_call.1} parent=1 // pred_fallthru
      _
    %v33 = vld [vmem:[#allocation3] sm:$0xff]
    %v34 = vld [vmem:[#allocation3 + $0x8] sm:$0xff]
    %v35 = vld [vmem:[#allocation3 + $0x10] sm:$0xff]
    %v36 = vld [vmem:[#allocation3 + $0x18] sm:$0xff]
    %v37 = vld [vmem:[#allocation3 + $0x20] sm:$0xff]
    %v38 = vld [vmem:[#allocation3 + $0x28] sm:$0xff]
    %v39 = vld [vmem:[#allocation3 + $0x30] sm:$0xff]
    %v40 = vld [vmem:[#allocation3 + $0x38] sm:$0xff]
    %v41 = vld [vmem:[%s1] sm:$0x1]
    %s42 = sld [smem:[#allocation2]]
    %v44 = vlaneseq
    %v45 = vshrl.u32 %v44, 7
    %v46 = vsub.s32 0, %v45
    %v47 = vrot.slane %v41, %v46
    %v49 = vmul.f32 %v33, %v47
    %v50 = vmul.f32 %v34, %v47
    %v51 = vmul.f32 %v35, %v47
    %v52 = vmul.f32 %v36, %v47
    %v53 = vmul.f32 %v37, %v47
    %v54 = vmul.f32 %v38, %v47
    %v55 = vmul.f32 %v39, %v47
    %v56 = vmul.f32 %v40, %v47
    %vm57 = vcmask 261120
    %v58 = vsel %vm57, %v49, 0.0
    %59 = vadd.xlane.f32.xlu0 %v58
    %v60 = vpop.xlane.xlu0 %59
    %v61 = vsel %vm57, %v50, 0.0
    %62 = vadd.xlane.f32.xlu0 %v61
    %v63 = vpop.xlane.xlu0 %62
    %v64 = vsel %vm57, %v51, 0.0
    %65 = vadd.xlane.f32.xlu0 %v64
    %v66 = vpop.xlane.xlu0 %65
    %v67 = vsel %vm57, %v52, 0.0
    %68 = vadd.xlane.f32.xlu0 %v67
    %v69 = vpop.xlane.xlu0 %68
    %v70 = vsel %vm57, %v53, 0.0
    %71 = vadd.xlane.f32.xlu0 %v70
    %v72 = vpop.xlane.xlu0 %71
    %v73 = vsel %vm57, %v54, 0.0
    %74 = vadd.xlane.f32.xlu0 %v73
    %v75 = vpop.xlane.xlu0 %74
    %v76 = vsel %vm57, %v55, 0.0
    %77 = vadd.xlane.f32.xlu0 %v76
    %v78 = vpop.xlane.xlu0 %77
    %v79 = vsel %vm57, %v56, 0.0
    %80 = vadd.xlane.f32.xlu0 %v79
    %v81 = vpop.xlane.xlu0 %80
    %v82 = vstv %s42
    %v83 = vadd.f32 %v60, %v82
    %v84 = vadd.f32 %v63, %v82
    %v85 = vadd.f32 %v66, %v82
    %v86 = vadd.f32 %v69, %v82
    %v87 = vadd.f32 %v72, %v82
    %v88 = vadd.f32 %v75, %v82
    %v89 = vadd.f32 %v78, %v82
    %v90 = vadd.f32 %v81, %v82
    %v99 = vlaneseq
    %v100 = vand.u32 %v99, 127
    %v101 = vlaneseq
    %v102 = vshrl.u32 %v101, 7
    %v103 = vsub.s32 %v100, %v102
    %v104 = vrot.slane %v83, %v103
    %v105 = vlaneseq
    %v106 = vshrl.u32 %v105, 7
    %v107 = vsub.s32 %v100, %v106
    %v108 = vrot.slane %v84, %v107
    %v109 = vlaneseq
    %v110 = vshrl.u32 %v109, 7
    %v111 = vsub.s32 %v100, %v110
    %v112 = vrot.slane %v85, %v111
    %v113 = vlaneseq
    %v114 = vshrl.u32 %v113, 7
    %v115 = vsub.s32 %v100, %v114
    %v116 = vrot.slane %v86, %v115
    %v117 = vlaneseq
    %v118 = vshrl.u32 %v117, 7
    %v119 = vsub.s32 %v100, %v118
    %v120 = vrot.slane %v87, %v119
    %v121 = vlaneseq
    %v122 = vshrl.u32 %v121, 7
    %v123 = vsub.s32 %v100, %v122
    %v124 = vrot.slane %v88, %v123
    %v125 = vlaneseq
    %v126 = vshrl.u32 %v125, 7
    %v127 = vsub.s32 %v100, %v126
    %v128 = vrot.slane %v89, %v127
    %v129 = vlaneseq
    %v130 = vshrl.u32 %v129, 7
    %v131 = vsub.s32 %v100, %v130
    %v132 = vrot.slane %v90, %v131
    %vm133 = vcmask 1041409
    %v134 = vsel %vm133, %v108, %v104
    %vm135 = vcmask 1042434
    %v136 = vsel %vm135, %v112, %v134
    %vm137 = vcmask 1043459
    %v138 = vsel %vm137, %v116, %v136
    %vm139 = vcmask 1044484
    %v140 = vsel %vm139, %v120, %v138
    %vm141 = vcmask 1045509
    %v142 = vsel %vm141, %v124, %v140
    %vm143 = vcmask 1046534
    %v144 = vsel %vm143, %v128, %v142
    %vm145 = vcmask 1047559
    %v146 = vsel %vm145, %v132, %v144
    %vm148 = vcmask 64512
    %v149 = vsel %vm148, %v146, -inf
    %150 = vmax.xlane.f32.xlu0 %v149
    %v151 = vpop.xlane.xlu0 %150
    %v153 = vlaneseq
    %v154 = vshrl.u32 %v153, 7
    %v155 = vsub.s32 0, %v154
    %v156 = vrot.slane %v151, %v155
    %v157 = vlaneseq
    %v158 = vshrl.u32 %v157, 7
    %v159 = vsub.s32 1, %v158
    %v160 = vrot.slane %v151, %v159
    %v161 = vlaneseq
    %v162 = vshrl.u32 %v161, 7
    %v163 = vsub.s32 2, %v162
    %v164 = vrot.slane %v151, %v163
    %v165 = vlaneseq
    %v166 = vshrl.u32 %v165, 7
    %v167 = vsub.s32 3, %v166
    %v168 = vrot.slane %v151, %v167
    %v169 = vlaneseq
    %v170 = vshrl.u32 %v169, 7
    %v171 = vsub.s32 4, %v170
    %v172 = vrot.slane %v151, %v171
    %v173 = vlaneseq
    %v174 = vshrl.u32 %v173, 7
    %v175 = vsub.s32 5, %v174
    %v176 = vrot.slane %v151, %v175
    %v177 = vlaneseq
    %v178 = vshrl.u32 %v177, 7
    %v179 = vsub.s32 6, %v178
    %v180 = vrot.slane %v151, %v179
    %v181 = vlaneseq
    %v182 = vshrl.u32 %v181, 7
    %v183 = vsub.s32 7, %v182
    %v184 = vrot.slane %v151, %v183
    %v193 = vsub.f32 %v83, %v156
    %v194 = vsub.f32 %v84, %v160
    %v195 = vsub.f32 %v85, %v164
    %v196 = vsub.f32 %v86, %v168
    %v197 = vsub.f32 %v87, %v172
    %v198 = vsub.f32 %v88, %v176
    %v199 = vsub.f32 %v89, %v180
    %v200 = vsub.f32 %v90, %v184
    %v201 = vmul.f32 %v193, 1.442695
    %v202 = vpow.pop %v201
    %v203 = vmul.f32 %v194, 1.442695
    %v204 = vpow.pop %v203
    %v205 = vmul.f32 %v195, 1.442695
    %v206 = vpow.pop %v205
    %v207 = vmul.f32 %v196, 1.442695
    %v208 = vpow.pop %v207
    %v209 = vmul.f32 %v197, 1.442695
    %v210 = vpow.pop %v209
    %v211 = vmul.f32 %v198, 1.442695
    %v212 = vpow.pop %v211
    %v213 = vmul.f32 %v199, 1.442695
    %v214 = vpow.pop %v213
    %v215 = vmul.f32 %v200, 1.442695
    %v216 = vpow.pop %v215
    %225 = vset.pattern.permute.xlu0 0
    %226 = vperm.xlu0 %225, %v202
    %v227 = vpop.permute.xlu0 %226
    %228 = vset.pattern.permute.xlu0 0
    %229 = vperm.xlu0 %228, %v204
    %v230 = vpop.permute.xlu0 %229
    %231 = vset.pattern.permute.xlu0 0
    %232 = vperm.xlu0 %231, %v206
    %v233 = vpop.permute.xlu0 %232
    %234 = vset.pattern.permute.xlu0 0
    %235 = vperm.xlu0 %234, %v208
    %v236 = vpop.permute.xlu0 %235
    %237 = vset.pattern.permute.xlu0 0
    %238 = vperm.xlu0 %237, %v210
    %v239 = vpop.permute.xlu0 %238
    %240 = vset.pattern.permute.xlu0 0
    %241 = vperm.xlu0 %240, %v212
    %v242 = vpop.permute.xlu0 %241
    %243 = vset.pattern.permute.xlu0 0
    %244 = vperm.xlu0 %243, %v214
    %v245 = vpop.permute.xlu0 %244
    %246 = vset.pattern.permute.xlu0 0
    %247 = vperm.xlu0 %246, %v216
    %v248 = vpop.permute.xlu0 %247
    %v249 = vlaneseq
    %v250 = vshrl.u32 %v249, 7
    %v251 = vsub.s32 %v100, %v250
    %v252 = vrot.slane %v227, %v251
    %v253 = vlaneseq
    %v254 = vshrl.u32 %v253, 7
    %v255 = vsub.s32 %v100, %v254
    %v256 = vrot.slane %v230, %v255
    %v257 = vlaneseq
    %v258 = vshrl.u32 %v257, 7
    %v259 = vsub.s32 %v100, %v258
    %v260 = vrot.slane %v233, %v259
    %v261 = vlaneseq
    %v262 = vshrl.u32 %v261, 7
    %v263 = vsub.s32 %v100, %v262
    %v264 = vrot.slane %v236, %v263
    %v265 = vlaneseq
    %v266 = vshrl.u32 %v265, 7
    %v267 = vsub.s32 %v100, %v266
    %v268 = vrot.slane %v239, %v267
    %v269 = vlaneseq
    %v270 = vshrl.u32 %v269, 7
    %v271 = vsub.s32 %v100, %v270
    %v272 = vrot.slane %v242, %v271
    %v273 = vlaneseq
    %v274 = vshrl.u32 %v273, 7
    %v275 = vsub.s32 %v100, %v274
    %v276 = vrot.slane %v245, %v275
    %v277 = vlaneseq
    %v278 = vshrl.u32 %v277, 7
    %v279 = vsub.s32 %v100, %v278
    %v280 = vrot.slane %v248, %v279
    %v281 = vsel %vm133, %v256, %v252
    %v282 = vsel %vm135, %v260, %v281
    %v283 = vsel %vm137, %v264, %v282
    %v284 = vsel %vm139, %v268, %v283
    %v285 = vsel %vm141, %v272, %v284
    %v286 = vsel %vm143, %v276, %v285
    %v287 = vsel %vm145, %v280, %v286
    %v289 = vsel %vm148, %v287, 0.0
    %290 = vadd.xlane.f32.xlu0 %v289
    %v291 = vpop.xlane.xlu0 %290
    %v292 = vrcp.pop %v291
    %v294 = vlaneseq
    %v295 = vshrl.u32 %v294, 7
    %v296 = vsub.s32 0, %v295
    %v297 = vrot.slane %v292, %v296
    %v298 = vlaneseq
    %v299 = vshrl.u32 %v298, 7
    %v300 = vsub.s32 1, %v299
    %v301 = vrot.slane %v292, %v300
    %v302 = vlaneseq
    %v303 = vshrl.u32 %v302, 7
    %v304 = vsub.s32 2, %v303
    %v305 = vrot.slane %v292, %v304
    %v306 = vlaneseq
    %v307 = vshrl.u32 %v306, 7
    %v308 = vsub.s32 3, %v307
    %v309 = vrot.slane %v292, %v308
    %v310 = vlaneseq
    %v311 = vshrl.u32 %v310, 7
    %v312 = vsub.s32 4, %v311
    %v313 = vrot.slane %v292, %v312
    %v314 = vlaneseq
    %v315 = vshrl.u32 %v314, 7
    %v316 = vsub.s32 5, %v315
    %v317 = vrot.slane %v292, %v316
    %v318 = vlaneseq
    %v319 = vshrl.u32 %v318, 7
    %v320 = vsub.s32 6, %v319
    %v321 = vrot.slane %v292, %v320
    %v322 = vlaneseq
    %v323 = vshrl.u32 %v322, 7
    %v324 = vsub.s32 7, %v323
    %v325 = vrot.slane %v292, %v324
    %v334 = vmul.f32 %v202, %v297
    %v335 = vmul.f32 %v204, %v301
    %v336 = vmul.f32 %v206, %v305
    %v337 = vmul.f32 %v208, %v309
    %v338 = vmul.f32 %v210, %v313
    %v339 = vmul.f32 %v212, %v317
    %v340 = vmul.f32 %v214, %v321
    %v341 = vmul.f32 %v216, %v325
    %343 = vset.pattern.permute.xlu0 0
    %344 = vperm.xlu0 %343, %v334
    %v345 = vpop.permute.xlu0 %344
    %v346 = vlaneseq
    %v347 = vshrl.u32 %v346, 7
    %v348 = vsub.s32 %v100, %v347
    %v349 = vrot.slane %v345, %v348
    %v350 = vsel %vm148, %v349, 0
    %352 = vmatprep.subr.mxu0 0.0
    %353 = vmatpush1.msra.mxu0 0.0
    %354 = vmatprep.subr.mxu0 0.0
    %355 = vmatpush1.msra.mxu0 0.0
    %356 = vmatprep.subr.mxu0 0.0
    %357 = vmatpush1.msra.mxu0 0.0
    %358 = vmatprep.subr.mxu0 0.0
    %359 = vmatpush1.msra.mxu0 0.0
    %360 = vmatprep.subr.mxu0 0.0
    %361 = vmatpush1.msra.mxu0 0.0
    %362 = vmatprep.subr.mxu0 0.0
    %363 = vmatpush1.msra.mxu0 0.0
    %364 = vmatprep.subr.mxu0 0.0
    %365 = vmatpush1.msra.mxu0 0.0
    %366 = vmatprep.subr.mxu0 0.0
    %367 = vmatpush1.msra.mxu0 0.0
    %368 = vmatprep.subr.mxu0 0.0
    %369 = vmatpush1.msra.mxu0 0.0
    %370 = vmatprep.subr.mxu0 0.0
    %371 = vmatpush1.msra.mxu0 0.0
    %372 = vmatprep.subr.mxu0 0.0
    %373 = vmatpush1.msra.mxu0 0.0
    %374 = vmatprep.subr.mxu0 0.0
    %375 = vmatpush1.msra.mxu0 0.0
    %376 = vmatprep.subr.mxu0 0.0
    %377 = vmatpush1.msra.mxu0 0.0
    %378 = vmatprep.subr.mxu0 0.0
    %379 = vmatpush1.msra.mxu0 0.0
    %380 = vmatprep.subr.mxu0 0.0
    %381 = vmatpush1.msra.mxu0 0.0
    %382 = vmatprep.subr.mxu0 0.0
    %383 = vmatpush1.msra.mxu0 %v33
    %384 = vmatprep.subr.mxu0 0.0
    %385 = vmatpush2.msra.mxu0 0.0
    %386 = vmatprep.subr.mxu0 0.0
    %387 = vmatpush2.msra.mxu0 0.0
    %388 = vmatprep.subr.mxu0 0.0
    %389 = vmatpush2.msra.mxu0 0.0
    %390 = vmatprep.subr.mxu0 0.0
    %391 = vmatpush2.msra.mxu0 0.0
    %392 = vmatprep.subr.mxu0 0.0
    %393 = vmatpush2.msra.mxu0 0.0
    %394 = vmatprep.subr.mxu0 0.0
    %395 = vmatpush2.msra.mxu0 0.0
    %396 = vmatprep.subr.mxu0 0.0
    %397 = vmatpush2.msra.mxu0 0.0
    %398 = vmatprep.subr.mxu0 0.0
    %399 = vmatpush2.msra.mxu0 0.0
    %400 = vmatprep.subr.mxu0 0.0
    %401 = vmatpush2.msra.mxu0 0.0
    %402 = vmatprep.subr.mxu0 0.0
    %403 = vmatpush2.msra.mxu0 0.0
    %404 = vmatprep.subr.mxu0 0.0
    %405 = vmatpush2.msra.mxu0 0.0
    %406 = vmatprep.subr.mxu0 0.0
    %407 = vmatpush2.msra.mxu0 0.0
    %408 = vmatprep.subr.mxu0 0.0
    %409 = vmatpush2.msra.mxu0 0.0
    %410 = vmatprep.subr.mxu0 0.0
    %411 = vmatpush2.msra.mxu0 0.0
    %412 = vmatprep.subr.mxu0 0.0
    %413 = vmatpush2.msra.mxu0 0.0
    %414 = vmatprep.subr.mxu0 0.0
    %415 = vmatpush2.msra.mxu0 0.0
    %416 = vmatprep.mubr.f32.mxu0 0.0
    %417 = vmatmul.mubr.f32.gmra.mxu0 %v350
    %v418 = vpop.f32.mrf.mxu0
    %v419 = vadd.f32 0.0, %v418
    %v420 = vpop.f32.mrf.mxu0
    %421 = vdwg.mxu0
    %423 = vset.pattern.permute.xlu0 0
    %424 = vperm.xlu0 %423, %v335
    %v425 = vpop.permute.xlu0 %424
    %v426 = vlaneseq
    %v427 = vshrl.u32 %v426, 7
    %v428 = vsub.s32 %v100, %v427
    %v429 = vrot.slane %v425, %v428
    %v430 = vsel %vm148, %v429, 0
    %432 = vmatprep.subr.mxu0 0.0
    %433 = vmatpush1.msra.mxu0 0.0
    %434 = vmatprep.subr.mxu0 0.0
    %435 = vmatpush1.msra.mxu0 0.0
    %436 = vmatprep.subr.mxu0 0.0
    %437 = vmatpush1.msra.mxu0 0.0
    %438 = vmatprep.subr.mxu0 0.0
    %439 = vmatpush1.msra.mxu0 0.0
    %440 = vmatprep.subr.mxu0 0.0
    %441 = vmatpush1.msra.mxu0 0.0
    %442 = vmatprep.subr.mxu0 0.0
    %443 = vmatpush1.msra.mxu0 0.0
    %444 = vmatprep.subr.mxu0 0.0
    %445 = vmatpush1.msra.mxu0 0.0
    %446 = vmatprep.subr.mxu0 0.0
    %447 = vmatpush1.msra.mxu0 0.0
    %448 = vmatprep.subr.mxu0 0.0
    %449 = vmatpush1.msra.mxu0 0.0
    %450 = vmatprep.subr.mxu0 0.0
    %451 = vmatpush1.msra.mxu0 0.0
    %452 = vmatprep.subr.mxu0 0.0
    %453 = vmatpush1.msra.mxu0 0.0
    %454 = vmatprep.subr.mxu0 0.0
    %455 = vmatpush1.msra.mxu0 0.0
    %456 = vmatprep.subr.mxu0 0.0
    %457 = vmatpush1.msra.mxu0 0.0
    %458 = vmatprep.subr.mxu0 0.0
    %459 = vmatpush1.msra.mxu0 0.0
    %460 = vmatprep.subr.mxu0 0.0
    %461 = vmatpush1.msra.mxu0 0.0
    %462 = vmatprep.subr.mxu0 0.0
    %463 = vmatpush1.msra.mxu0 %v34
    %464 = vmatprep.subr.mxu0 0.0
    %465 = vmatpush2.msra.mxu0 0.0
    %466 = vmatprep.subr.mxu0 0.0
    %467 = vmatpush2.msra.mxu0 0.0
    %468 = vmatprep.subr.mxu0 0.0
    %469 = vmatpush2.msra.mxu0 0.0
    %470 = vmatprep.subr.mxu0 0.0
    %471 = vmatpush2.msra.mxu0 0.0
    %472 = vmatprep.subr.mxu0 0.0
    %473 = vmatpush2.msra.mxu0 0.0
    %474 = vmatprep.subr.mxu0 0.0
    %475 = vmatpush2.msra.mxu0 0.0
    %476 = vmatprep.subr.mxu0 0.0
    %477 = vmatpush2.msra.mxu0 0.0
    %478 = vmatprep.subr.mxu0 0.0
    %479 = vmatpush2.msra.mxu0 0.0
    %480 = vmatprep.subr.mxu0 0.0
    %481 = vmatpush2.msra.mxu0 0.0
    %482 = vmatprep.subr.mxu0 0.0
    %483 = vmatpush2.msra.mxu0 0.0
    %484 = vmatprep.subr.mxu0 0.0
    %485 = vmatpush2.msra.mxu0 0.0
    %486 = vmatprep.subr.mxu0 0.0
    %487 = vmatpush2.msra.mxu0 0.0
    %488 = vmatprep.subr.mxu0 0.0
    %489 = vmatpush2.msra.mxu0 0.0
    %490 = vmatprep.subr.mxu0 0.0
    %491 = vmatpush2.msra.mxu0 0.0
    %492 = vmatprep.subr.mxu0 0.0
    %493 = vmatpush2.msra.mxu0 0.0
    %494 = vmatprep.subr.mxu0 0.0
    %495 = vmatpush2.msra.mxu0 0.0
    %496 = vmatprep.mubr.f32.mxu0 0.0
    %497 = vmatmul.mubr.f32.gmra.mxu0 %v430
    %v498 = vpop.f32.mrf.mxu0
    %v499 = vadd.f32 0.0, %v498
    %v500 = vpop.f32.mrf.mxu0
    %501 = vdwg.mxu0
    %503 = vset.pattern.permute.xlu0 0
    %504 = vperm.xlu0 %503, %v336
    %v505 = vpop.permute.xlu0 %504
    %v506 = vlaneseq
    %v507 = vshrl.u32 %v506, 7
    %v508 = vsub.s32 %v100, %v507
    %v509 = vrot.slane %v505, %v508
    %v510 = vsel %vm148, %v509, 0
    %512 = vmatprep.subr.mxu0 0.0
    %513 = vmatpush1.msra.mxu0 0.0
    %514 = vmatprep.subr.mxu0 0.0
    %515 = vmatpush1.msra.mxu0 0.0
    %516 = vmatprep.subr.mxu0 0.0
    %517 = vmatpush1.msra.mxu0 0.0
    %518 = vmatprep.subr.mxu0 0.0
    %519 = vmatpush1.msra.mxu0 0.0
    %520 = vmatprep.subr.mxu0 0.0
    %521 = vmatpush1.msra.mxu0 0.0
    %522 = vmatprep.subr.mxu0 0.0
    %523 = vmatpush1.msra.mxu0 0.0
    %524 = vmatprep.subr.mxu0 0.0
    %525 = vmatpush1.msra.mxu0 0.0
    %526 = vmatprep.subr.mxu0 0.0
    %527 = vmatpush1.msra.mxu0 0.0
    %528 = vmatprep.subr.mxu0 0.0
    %529 = vmatpush1.msra.mxu0 0.0
    %530 = vmatprep.subr.mxu0 0.0
    %531 = vmatpush1.msra.mxu0 0.0
    %532 = vmatprep.subr.mxu0 0.0
    %533 = vmatpush1.msra.mxu0 0.0
    %534 = vmatprep.subr.mxu0 0.0
    %535 = vmatpush1.msra.mxu0 0.0
    %536 = vmatprep.subr.mxu0 0.0
    %537 = vmatpush1.msra.mxu0 0.0
    %538 = vmatprep.subr.mxu0 0.0
    %539 = vmatpush1.msra.mxu0 0.0
    %540 = vmatprep.subr.mxu0 0.0
    %541 = vmatpush1.msra.mxu0 0.0
    %542 = vmatprep.subr.mxu0 0.0
    %543 = vmatpush1.msra.mxu0 %v35
    %544 = vmatprep.subr.mxu0 0.0
    %545 = vmatpush2.msra.mxu0 0.0
    %546 = vmatprep.subr.mxu0 0.0
    %547 = vmatpush2.msra.mxu0 0.0
    %548 = vmatprep.subr.mxu0 0.0
    %549 = vmatpush2.msra.mxu0 0.0
    %550 = vmatprep.subr.mxu0 0.0
    %551 = vmatpush2.msra.mxu0 0.0
    %552 = vmatprep.subr.mxu0 0.0
    %553 = vmatpush2.msra.mxu0 0.0
    %554 = vmatprep.subr.mxu0 0.0
    %555 = vmatpush2.msra.mxu0 0.0
    %556 = vmatprep.subr.mxu0 0.0
    %557 = vmatpush2.msra.mxu0 0.0
    %558 = vmatprep.subr.mxu0 0.0
    %559 = vmatpush2.msra.mxu0 0.0
    %560 = vmatprep.subr.mxu0 0.0
    %561 = vmatpush2.msra.mxu0 0.0
    %562 = vmatprep.subr.mxu0 0.0
    %563 = vmatpush2.msra.mxu0 0.0
    %564 = vmatprep.subr.mxu0 0.0
    %565 = vmatpush2.msra.mxu0 0.0
    %566 = vmatprep.subr.mxu0 0.0
    %567 = vmatpush2.msra.mxu0 0.0
    %568 = vmatprep.subr.mxu0 0.0
    %569 = vmatpush2.msra.mxu0 0.0
    %570 = vmatprep.subr.mxu0 0.0
    %571 = vmatpush2.msra.mxu0 0.0
    %572 = vmatprep.subr.mxu0 0.0
    %573 = vmatpush2.msra.mxu0 0.0
    %574 = vmatprep.subr.mxu0 0.0
    %575 = vmatpush2.msra.mxu0 0.0
    %576 = vmatprep.mubr.f32.mxu0 0.0
    %577 = vmatmul.mubr.f32.gmra.mxu0 %v510
    %v578 = vpop.f32.mrf.mxu0
    %v579 = vadd.f32 0.0, %v578
    %v580 = vpop.f32.mrf.mxu0
    %581 = vdwg.mxu0
    %583 = vset.pattern.permute.xlu0 0
    %584 = vperm.xlu0 %583, %v337
    %v585 = vpop.permute.xlu0 %584
    %v586 = vlaneseq
    %v587 = vshrl.u32 %v586, 7
    %v588 = vsub.s32 %v100, %v587
    %v589 = vrot.slane %v585, %v588
    %v590 = vsel %vm148, %v589, 0
    %592 = vmatprep.subr.mxu0 0.0
    %593 = vmatpush1.msra.mxu0 0.0
    %594 = vmatprep.subr.mxu0 0.0
    %595 = vmatpush1.msra.mxu0 0.0
    %596 = vmatprep.subr.mxu0 0.0
    %597 = vmatpush1.msra.mxu0 0.0
    %598 = vmatprep.subr.mxu0 0.0
    %599 = vmatpush1.msra.mxu0 0.0
    %600 = vmatprep.subr.mxu0 0.0
    %601 = vmatpush1.msra.mxu0 0.0
    %602 = vmatprep.subr.mxu0 0.0
    %603 = vmatpush1.msra.mxu0 0.0
    %604 = vmatprep.subr.mxu0 0.0
    %605 = vmatpush1.msra.mxu0 0.0
    %606 = vmatprep.subr.mxu0 0.0
    %607 = vmatpush1.msra.mxu0 0.0
    %608 = vmatprep.subr.mxu0 0.0
    %609 = vmatpush1.msra.mxu0 0.0
    %610 = vmatprep.subr.mxu0 0.0
    %611 = vmatpush1.msra.mxu0 0.0
    %612 = vmatprep.subr.mxu0 0.0
    %613 = vmatpush1.msra.mxu0 0.0
    %614 = vmatprep.subr.mxu0 0.0
    %615 = vmatpush1.msra.mxu0 0.0
    %616 = vmatprep.subr.mxu0 0.0
    %617 = vmatpush1.msra.mxu0 0.0
    %618 = vmatprep.subr.mxu0 0.0
    %619 = vmatpush1.msra.mxu0 0.0
    %620 = vmatprep.subr.mxu0 0.0
    %621 = vmatpush1.msra.mxu0 0.0
    %622 = vmatprep.subr.mxu0 0.0
    %623 = vmatpush1.msra.mxu0 %v36
    %624 = vmatprep.subr.mxu0 0.0
    %625 = vmatpush2.msra.mxu0 0.0
    %626 = vmatprep.subr.mxu0 0.0
    %627 = vmatpush2.msra.mxu0 0.0
    %628 = vmatprep.subr.mxu0 0.0
    %629 = vmatpush2.msra.mxu0 0.0
    %630 = vmatprep.subr.mxu0 0.0
    %631 = vmatpush2.msra.mxu0 0.0
    %632 = vmatprep.subr.mxu0 0.0
    %633 = vmatpush2.msra.mxu0 0.0
    %634 = vmatprep.subr.mxu0 0.0
    %635 = vmatpush2.msra.mxu0 0.0
    %636 = vmatprep.subr.mxu0 0.0
    %637 = vmatpush2.msra.mxu0 0.0
    %638 = vmatprep.subr.mxu0 0.0
    %639 = vmatpush2.msra.mxu0 0.0
    %640 = vmatprep.subr.mxu0 0.0
    %641 = vmatpush2.msra.mxu0 0.0
    %642 = vmatprep.subr.mxu0 0.0
    %643 = vmatpush2.msra.mxu0 0.0
    %644 = vmatprep.subr.mxu0 0.0
    %645 = vmatpush2.msra.mxu0 0.0
    %646 = vmatprep.subr.mxu0 0.0
    %647 = vmatpush2.msra.mxu0 0.0
    %648 = vmatprep.subr.mxu0 0.0
    %649 = vmatpush2.msra.mxu0 0.0
    %650 = vmatprep.subr.mxu0 0.0
    %651 = vmatpush2.msra.mxu0 0.0
    %652 = vmatprep.subr.mxu0 0.0
    %653 = vmatpush2.msra.mxu0 0.0
    %654 = vmatprep.subr.mxu0 0.0
    %655 = vmatpush2.msra.mxu0 0.0
    %656 = vmatprep.mubr.f32.mxu0 0.0
    %657 = vmatmul.mubr.f32.gmra.mxu0 %v590
    %v658 = vpop.f32.mrf.mxu0
    %v659 = vadd.f32 0.0, %v658
    %v660 = vpop.f32.mrf.mxu0
    %661 = vdwg.mxu0
    %663 = vset.pattern.permute.xlu0 0
    %664 = vperm.xlu0 %663, %v338
    %v665 = vpop.permute.xlu0 %664
    %v666 = vlaneseq
    %v667 = vshrl.u32 %v666, 7
    %v668 = vsub.s32 %v100, %v667
    %v669 = vrot.slane %v665, %v668
    %v670 = vsel %vm148, %v669, 0
    %672 = vmatprep.subr.mxu0 0.0
    %673 = vmatpush1.msra.mxu0 0.0
    %674 = vmatprep.subr.mxu0 0.0
    %675 = vmatpush1.msra.mxu0 0.0
    %676 = vmatprep.subr.mxu0 0.0
    %677 = vmatpush1.msra.mxu0 0.0
    %678 = vmatprep.subr.mxu0 0.0
    %679 = vmatpush1.msra.mxu0 0.0
    %680 = vmatprep.subr.mxu0 0.0
    %681 = vmatpush1.msra.mxu0 0.0
    %682 = vmatprep.subr.mxu0 0.0
    %683 = vmatpush1.msra.mxu0 0.0
    %684 = vmatprep.subr.mxu0 0.0
    %685 = vmatpush1.msra.mxu0 0.0
    %686 = vmatprep.subr.mxu0 0.0
    %687 = vmatpush1.msra.mxu0 0.0
    %688 = vmatprep.subr.mxu0 0.0
    %689 = vmatpush1.msra.mxu0 0.0
    %690 = vmatprep.subr.mxu0 0.0
    %691 = vmatpush1.msra.mxu0 0.0
    %692 = vmatprep.subr.mxu0 0.0
    %693 = vmatpush1.msra.mxu0 0.0
    %694 = vmatprep.subr.mxu0 0.0
    %695 = vmatpush1.msra.mxu0 0.0
    %696 = vmatprep.subr.mxu0 0.0
    %697 = vmatpush1.msra.mxu0 0.0
    %698 = vmatprep.subr.mxu0 0.0
    %699 = vmatpush1.msra.mxu0 0.0
    %700 = vmatprep.subr.mxu0 0.0
    %701 = vmatpush1.msra.mxu0 0.0
    %702 = vmatprep.subr.mxu0 0.0
    %703 = vmatpush1.msra.mxu0 %v37
    %704 = vmatprep.subr.mxu0 0.0
    %705 = vmatpush2.msra.mxu0 0.0
    %706 = vmatprep.subr.mxu0 0.0
    %707 = vmatpush2.msra.mxu0 0.0
    %708 = vmatprep.subr.mxu0 0.0
    %709 = vmatpush2.msra.mxu0 0.0
    %710 = vmatprep.subr.mxu0 0.0
    %711 = vmatpush2.msra.mxu0 0.0
    %712 = vmatprep.subr.mxu0 0.0
    %713 = vmatpush2.msra.mxu0 0.0
    %714 = vmatprep.subr.mxu0 0.0
    %715 = vmatpush2.msra.mxu0 0.0
    %716 = vmatprep.subr.mxu0 0.0
    %717 = vmatpush2.msra.mxu0 0.0
    %718 = vmatprep.subr.mxu0 0.0
    %719 = vmatpush2.msra.mxu0 0.0
    %720 = vmatprep.subr.mxu0 0.0
    %721 = vmatpush2.msra.mxu0 0.0
    %722 = vmatprep.subr.mxu0 0.0
    %723 = vmatpush2.msra.mxu0 0.0
    %724 = vmatprep.subr.mxu0 0.0
    %725 = vmatpush2.msra.mxu0 0.0
    %726 = vmatprep.subr.mxu0 0.0
    %727 = vmatpush2.msra.mxu0 0.0
    %728 = vmatprep.subr.mxu0 0.0
    %729 = vmatpush2.msra.mxu0 0.0
    %730 = vmatprep.subr.mxu0 0.0
    %731 = vmatpush2.msra.mxu0 0.0
    %732 = vmatprep.subr.mxu0 0.0
    %733 = vmatpush2.msra.mxu0 0.0
    %734 = vmatprep.subr.mxu0 0.0
    %735 = vmatpush2.msra.mxu0 0.0
    %736 = vmatprep.mubr.f32.mxu0 0.0
    %737 = vmatmul.mubr.f32.gmra.mxu0 %v670
    %v738 = vpop.f32.mrf.mxu0
    %v739 = vadd.f32 0.0, %v738
    %v740 = vpop.f32.mrf.mxu0
    %741 = vdwg.mxu0
    %743 = vset.pattern.permute.xlu0 0
    %744 = vperm.xlu0 %743, %v339
    %v745 = vpop.permute.xlu0 %744
    %v746 = vlaneseq
    %v747 = vshrl.u32 %v746, 7
    %v748 = vsub.s32 %v100, %v747
    %v749 = vrot.slane %v745, %v748
    %v750 = vsel %vm148, %v749, 0
    %752 = vmatprep.subr.mxu0 0.0
    %753 = vmatpush1.msra.mxu0 0.0
    %754 = vmatprep.subr.mxu0 0.0
    %755 = vmatpush1.msra.mxu0 0.0
    %756 = vmatprep.subr.mxu0 0.0
    %757 = vmatpush1.msra.mxu0 0.0
    %758 = vmatprep.subr.mxu0 0.0
    %759 = vmatpush1.msra.mxu0 0.0
    %760 = vmatprep.subr.mxu0 0.0
    %761 = vmatpush1.msra.mxu0 0.0
    %762 = vmatprep.subr.mxu0 0.0
    %763 = vmatpush1.msra.mxu0 0.0
    %764 = vmatprep.subr.mxu0 0.0
    %765 = vmatpush1.msra.mxu0 0.0
    %766 = vmatprep.subr.mxu0 0.0
    %767 = vmatpush1.msra.mxu0 0.0
    %768 = vmatprep.subr.mxu0 0.0
    %769 = vmatpush1.msra.mxu0 0.0
    %770 = vmatprep.subr.mxu0 0.0
    %771 = vmatpush1.msra.mxu0 0.0
    %772 = vmatprep.subr.mxu0 0.0
    %773 = vmatpush1.msra.mxu0 0.0
    %774 = vmatprep.subr.mxu0 0.0
    %775 = vmatpush1.msra.mxu0 0.0
    %776 = vmatprep.subr.mxu0 0.0
    %777 = vmatpush1.msra.mxu0 0.0
    %778 = vmatprep.subr.mxu0 0.0
    %779 = vmatpush1.msra.mxu0 0.0
    %780 = vmatprep.subr.mxu0 0.0
    %781 = vmatpush1.msra.mxu0 0.0
    %782 = vmatprep.subr.mxu0 0.0
    %783 = vmatpush1.msra.mxu0 %v38
    %784 = vmatprep.subr.mxu0 0.0
    %785 = vmatpush2.msra.mxu0 0.0
    %786 = vmatprep.subr.mxu0 0.0
    %787 = vmatpush2.msra.mxu0 0.0
    %788 = vmatprep.subr.mxu0 0.0
    %789 = vmatpush2.msra.mxu0 0.0
    %790 = vmatprep.subr.mxu0 0.0
    %791 = vmatpush2.msra.mxu0 0.0
    %792 = vmatprep.subr.mxu0 0.0
    %793 = vmatpush2.msra.mxu0 0.0
    %794 = vmatprep.subr.mxu0 0.0
    %795 = vmatpush2.msra.mxu0 0.0
    %796 = vmatprep.subr.mxu0 0.0
    %797 = vmatpush2.msra.mxu0 0.0
    %798 = vmatprep.subr.mxu0 0.0
    %799 = vmatpush2.msra.mxu0 0.0
    %800 = vmatprep.subr.mxu0 0.0
    %801 = vmatpush2.msra.mxu0 0.0
    %802 = vmatprep.subr.mxu0 0.0
    %803 = vmatpush2.msra.mxu0 0.0
    %804 = vmatprep.subr.mxu0 0.0
    %805 = vmatpush2.msra.mxu0 0.0
    %806 = vmatprep.subr.mxu0 0.0
    %807 = vmatpush2.msra.mxu0 0.0
    %808 = vmatprep.subr.mxu0 0.0
    %809 = vmatpush2.msra.mxu0 0.0
    %810 = vmatprep.subr.mxu0 0.0
    %811 = vmatpush2.msra.mxu0 0.0
    %812 = vmatprep.subr.mxu0 0.0
    %813 = vmatpush2.msra.mxu0 0.0
    %814 = vmatprep.subr.mxu0 0.0
    %815 = vmatpush2.msra.mxu0 0.0
    %816 = vmatprep.mubr.f32.mxu0 0.0
    %817 = vmatmul.mubr.f32.gmra.mxu0 %v750
    %v818 = vpop.f32.mrf.mxu0
    %v819 = vadd.f32 0.0, %v818
    %v820 = vpop.f32.mrf.mxu0
    %821 = vdwg.mxu0
    %823 = vset.pattern.permute.xlu0 0
    %824 = vperm.xlu0 %823, %v340
    %v825 = vpop.permute.xlu0 %824
    %v826 = vlaneseq
    %v827 = vshrl.u32 %v826, 7
    %v828 = vsub.s32 %v100, %v827
    %v829 = vrot.slane %v825, %v828
    %v830 = vsel %vm148, %v829, 0
    %832 = vmatprep.subr.mxu0 0.0
    %833 = vmatpush1.msra.mxu0 0.0
    %834 = vmatprep.subr.mxu0 0.0
    %835 = vmatpush1.msra.mxu0 0.0
    %836 = vmatprep.subr.mxu0 0.0
    %837 = vmatpush1.msra.mxu0 0.0
    %838 = vmatprep.subr.mxu0 0.0
    %839 = vmatpush1.msra.mxu0 0.0
    %840 = vmatprep.subr.mxu0 0.0
    %841 = vmatpush1.msra.mxu0 0.0
    %842 = vmatprep.subr.mxu0 0.0
    %843 = vmatpush1.msra.mxu0 0.0
    %844 = vmatprep.subr.mxu0 0.0
    %845 = vmatpush1.msra.mxu0 0.0
    %846 = vmatprep.subr.mxu0 0.0
    %847 = vmatpush1.msra.mxu0 0.0
    %848 = vmatprep.subr.mxu0 0.0
    %849 = vmatpush1.msra.mxu0 0.0
    %850 = vmatprep.subr.mxu0 0.0
    %851 = vmatpush1.msra.mxu0 0.0
    %852 = vmatprep.subr.mxu0 0.0
    %853 = vmatpush1.msra.mxu0 0.0
    %854 = vmatprep.subr.mxu0 0.0
    %855 = vmatpush1.msra.mxu0 0.0
    %856 = vmatprep.subr.mxu0 0.0
    %857 = vmatpush1.msra.mxu0 0.0
    %858 = vmatprep.subr.mxu0 0.0
    %859 = vmatpush1.msra.mxu0 0.0
    %860 = vmatprep.subr.mxu0 0.0
    %861 = vmatpush1.msra.mxu0 0.0
    %862 = vmatprep.subr.mxu0 0.0
    %863 = vmatpush1.msra.mxu0 %v39
    %864 = vmatprep.subr.mxu0 0.0
    %865 = vmatpush2.msra.mxu0 0.0
    %866 = vmatprep.subr.mxu0 0.0
    %867 = vmatpush2.msra.mxu0 0.0
    %868 = vmatprep.subr.mxu0 0.0
    %869 = vmatpush2.msra.mxu0 0.0
    %870 = vmatprep.subr.mxu0 0.0
    %871 = vmatpush2.msra.mxu0 0.0
    %872 = vmatprep.subr.mxu0 0.0
    %873 = vmatpush2.msra.mxu0 0.0
    %874 = vmatprep.subr.mxu0 0.0
    %875 = vmatpush2.msra.mxu0 0.0
    %876 = vmatprep.subr.mxu0 0.0
    %877 = vmatpush2.msra.mxu0 0.0
    %878 = vmatprep.subr.mxu0 0.0
    %879 = vmatpush2.msra.mxu0 0.0
    %880 = vmatprep.subr.mxu0 0.0
    %881 = vmatpush2.msra.mxu0 0.0
    %882 = vmatprep.subr.mxu0 0.0
    %883 = vmatpush2.msra.mxu0 0.0
    %884 = vmatprep.subr.mxu0 0.0
    %885 = vmatpush2.msra.mxu0 0.0
    %886 = vmatprep.subr.mxu0 0.0
    %887 = vmatpush2.msra.mxu0 0.0
    %888 = vmatprep.subr.mxu0 0.0
    %889 = vmatpush2.msra.mxu0 0.0
    %890 = vmatprep.subr.mxu0 0.0
    %891 = vmatpush2.msra.mxu0 0.0
    %892 = vmatprep.subr.mxu0 0.0
    %893 = vmatpush2.msra.mxu0 0.0
    %894 = vmatprep.subr.mxu0 0.0
    %895 = vmatpush2.msra.mxu0 0.0
    %896 = vmatprep.mubr.f32.mxu0 0.0
    %897 = vmatmul.mubr.f32.gmra.mxu0 %v830
    %v898 = vpop.f32.mrf.mxu0
    %v899 = vadd.f32 0.0, %v898
    %v900 = vpop.f32.mrf.mxu0
    %901 = vdwg.mxu0
    %903 = vset.pattern.permute.xlu0 0
    %904 = vperm.xlu0 %903, %v341
    %v905 = vpop.permute.xlu0 %904
    %v906 = vlaneseq
    %v907 = vshrl.u32 %v906, 7
    %v908 = vsub.s32 %v100, %v907
    %v909 = vrot.slane %v905, %v908
    %v910 = vsel %vm148, %v909, 0
    %912 = vmatprep.subr.mxu0 0.0
    %913 = vmatpush1.msra.mxu0 0.0
    %914 = vmatprep.subr.mxu0 0.0
    %915 = vmatpush1.msra.mxu0 0.0
    %916 = vmatprep.subr.mxu0 0.0
    %917 = vmatpush1.msra.mxu0 0.0
    %918 = vmatprep.subr.mxu0 0.0
    %919 = vmatpush1.msra.mxu0 0.0
    %920 = vmatprep.subr.mxu0 0.0
    %921 = vmatpush1.msra.mxu0 0.0
    %922 = vmatprep.subr.mxu0 0.0
    %923 = vmatpush1.msra.mxu0 0.0
    %924 = vmatprep.subr.mxu0 0.0
    %925 = vmatpush1.msra.mxu0 0.0
    %926 = vmatprep.subr.mxu0 0.0
    %927 = vmatpush1.msra.mxu0 0.0
    %928 = vmatprep.subr.mxu0 0.0
    %929 = vmatpush1.msra.mxu0 0.0
    %930 = vmatprep.subr.mxu0 0.0
    %931 = vmatpush1.msra.mxu0 0.0
    %932 = vmatprep.subr.mxu0 0.0
    %933 = vmatpush1.msra.mxu0 0.0
    %934 = vmatprep.subr.mxu0 0.0
    %935 = vmatpush1.msra.mxu0 0.0
    %936 = vmatprep.subr.mxu0 0.0
    %937 = vmatpush1.msra.mxu0 0.0
    %938 = vmatprep.subr.mxu0 0.0
    %939 = vmatpush1.msra.mxu0 0.0
    %940 = vmatprep.subr.mxu0 0.0
    %941 = vmatpush1.msra.mxu0 0.0
    %942 = vmatprep.subr.mxu0 0.0
    %943 = vmatpush1.msra.mxu0 %v40
    %944 = vmatprep.subr.mxu0 0.0
    %945 = vmatpush2.msra.mxu0 0.0
    %946 = vmatprep.subr.mxu0 0.0
    %947 = vmatpush2.msra.mxu0 0.0
    %948 = vmatprep.subr.mxu0 0.0
    %949 = vmatpush2.msra.mxu0 0.0
    %950 = vmatprep.subr.mxu0 0.0
    %951 = vmatpush2.msra.mxu0 0.0
    %952 = vmatprep.subr.mxu0 0.0
    %953 = vmatpush2.msra.mxu0 0.0
    %954 = vmatprep.subr.mxu0 0.0
    %955 = vmatpush2.msra.mxu0 0.0
    %956 = vmatprep.subr.mxu0 0.0
    %957 = vmatpush2.msra.mxu0 0.0
    %958 = vmatprep.subr.mxu0 0.0
    %959 = vmatpush2.msra.mxu0 0.0
    %960 = vmatprep.subr.mxu0 0.0
    %961 = vmatpush2.msra.mxu0 0.0
    %962 = vmatprep.subr.mxu0 0.0
    %963 = vmatpush2.msra.mxu0 0.0
    %964 = vmatprep.subr.mxu0 0.0
    %965 = vmatpush2.msra.mxu0 0.0
    %966 = vmatprep.subr.mxu0 0.0
    %967 = vmatpush2.msra.mxu0 0.0
    %968 = vmatprep.subr.mxu0 0.0
    %969 = vmatpush2.msra.mxu0 0.0
    %970 = vmatprep.subr.mxu0 0.0
    %971 = vmatpush2.msra.mxu0 0.0
    %972 = vmatprep.subr.mxu0 0.0
    %973 = vmatpush2.msra.mxu0 0.0
    %974 = vmatprep.subr.mxu0 0.0
    %975 = vmatpush2.msra.mxu0 0.0
    %976 = vmatprep.mubr.f32.mxu0 0.0
    %977 = vmatmul.mubr.f32.gmra.mxu0 %v910
    %v978 = vpop.f32.mrf.mxu0
    %v979 = vadd.f32 0.0, %v978
    %v980 = vpop.f32.mrf.mxu0
    %981 = vdwg.mxu0
    %v990 = vrot.slane %v499, 7
    %v991 = vsel %vm133, %v990, %v419
    %v992 = vrot.slane %v579, 6
    %v993 = vsel %vm135, %v992, %v991
    %v994 = vrot.slane %v659, 5
    %v995 = vsel %vm137, %v994, %v993
    %v996 = vrot.slane %v739, 4
    %v997 = vsel %vm139, %v996, %v995
    %v998 = vrot.slane %v819, 3
    %v999 = vsel %vm141, %v998, %v997
    %v1000 = vrot.slane %v899, 2
    %v1001 = vsel %vm143, %v1000, %v999
    %v1002 = vrot.slane %v979, 1
    %v1003 = vsel %vm145, %v1002, %v1001
    %1005 = vst.msk [vmem:[#allocation6] sm:$0xff] %vm57, %v1003
    %v1006 = vsel %vm133, %v429, %v349
    %v1007 = vsel %vm135, %v509, %v1006
    %v1008 = vsel %vm137, %v589, %v1007
    %v1009 = vsel %vm139, %v669, %v1008
    %v1010 = vsel %vm141, %v749, %v1009
    %v1011 = vsel %vm143, %v829, %v1010
    %v1012 = vsel %vm145, %v909, %v1011
    %1014 = vst.msk [vmem:[#allocation7] sm:$0xff] %vm148, %v1012
    // Predicated region
    $region18: #{tpu_custom_call.1} parent=1 // pred_check
      _
    $region19: #{tpu_custom_call.1} parent=1 // pred_check_branch
      %1016 = sbr.rel (0) target = $region21
    $region20: #{tpu_custom_call.1} parent=1 // pred_region
      %s1018 = ssub.s32 128, 128
      %1019 = vsyncadd [#allocation5], %s1018
      %s1021 = sshll.u32 [#allocation6], 4
      %s1022 = int_to_ptr.vmem [resolvable:$true] %s1021
      %1024 = dma.vmem_to_hbm [thread:$0]  %s1022, 128, %s3, [#allocation5]
    $region21: #{tpu_custom_call.1} parent=1 // pred_fallthru
      _
    // Predicated region
    $region22: #{tpu_custom_call.1} parent=1 // pred_check
      _
    $region23: #{tpu_custom_call.1} parent=1 // pred_check_branch
      %1026 = sbr.rel (0) target = $region25
    $region24: #{tpu_custom_call.1} parent=1 // pred_region
      %s1028 = ssub.s32 128, 128
      %1029 = vsyncadd [#allocation8], %s1028
      %s1031 = sshll.u32 [#allocation7], 4
      %s1032 = int_to_ptr.vmem [resolvable:$true] %s1031
      %1034 = dma.vmem_to_hbm [thread:$0]  %s1032, 128, %s4, [#allocation8]
    $region25: #{tpu_custom_call.1} parent=1 // pred_fallthru
      _
    // Predicated region
    $region26: #{tpu_custom_call.1} parent=1 // pred_check
      _
    $region27: #{tpu_custom_call.1} parent=1 // pred_check_branch
      %1036 = sbr.rel (0) target = $region29
    $region28: #{tpu_custom_call.1} parent=1 // pred_region
      %1037 = dma.done [#allocation5], 128
    $region29: #{tpu_custom_call.1} parent=1 // pred_fallthru
      _
    // Predicated region
    $region30: #{tpu_custom_call.1} parent=1 // pred_check
      _
    $region31: #{tpu_custom_call.1} parent=1 // pred_check_branch
      %1039 = sbr.rel (0) target = $region33
    $region32: #{tpu_custom_call.1} parent=1 // pred_region
      %1040 = dma.done [#allocation8], 128
    $region33: #{tpu_custom_call.1} parent=1 // pred_fallthru
      _
    %1041 = vsyncpa [#allocation4], 1
    %1042 = vsyncpa [#allocation5], 1
    %1043 = vsyncpa [#allocation8], 1

</llo_original>
